<compile_context>
chip_gen: v6e
topology: v6e:2x2x1
jax: 0.10.0
libtpu: 0.0.40
codegen_flags: <defaults>
</compile_context>

<pallas_src>
import functools

import jax
import jax.numpy as jnp
from jax.experimental import pallas as pl
from jax.experimental.pallas import tpu as pltpu

_LANE = 128


def _round_up(x, m):
    return ((x + m - 1) // m) * m


def _pad2d(x, rows, cols):
    r, c = x.shape
    if r == rows and c == cols:
        return x
    return jnp.pad(x, ((0, rows - r), (0, cols - c)))


def _pick_tile(dim, candidates=(512, 256, 128)):
    # dims are pre-padded to multiples of 128, so this always divides exactly.
    for c in candidates:
        if dim >= c and dim % c == 0:
            return c
    return dim


def _mm_kernel(x_ref, y_ref, b_ref, o_ref, acc_ref, *, apply_relu):
    """C = activation(X @ Y + b): K-accumulating tiled matmul with fused epilogue."""
    @pl.when(pl.program_id(2) == 0)
    def _():
        acc_ref[...] = jnp.zeros_like(acc_ref)

    acc_ref[...] += jnp.dot(x_ref[...], y_ref[...],
                            preferred_element_type=jnp.float32)

    @pl.when(pl.program_id(2) == pl.num_programs(2) - 1)
    def _():
        out = acc_ref[...] + b_ref[...]
        if apply_relu:
            out = jnp.maximum(out, 0.0)
        o_ref[...] = out.astype(o_ref.dtype)


def tiled_matmul(x, y, bias, *, apply_relu, out_dtype):
    """activation(x @ y + bias) with f32 accumulation; x/y expected bf16."""
    m, k = x.shape
    k2, n = y.shape
    assert k == k2 and bias.shape == (1, n)

    tm = _pick_tile(m)
    tn = _pick_tile(n, candidates=(256, 128))
    tk = _pick_tile(k)
    grid = (m // tm, n // tn, k // tk)

    kernel = functools.partial(_mm_kernel, apply_relu=apply_relu)
    flops = 2 * m * n * k
    bytes_accessed = (x.size * x.dtype.itemsize
                      + y.size * y.dtype.itemsize
                      + bias.size * bias.dtype.itemsize
                      + m * n * jnp.dtype(out_dtype).itemsize)

    return pl.pallas_call(
        kernel,
        out_shape=jax.ShapeDtypeStruct((m, n), out_dtype),
        grid_spec=pltpu.PrefetchScalarGridSpec(
            num_scalar_prefetch=0,
            grid=grid,
            in_specs=[
                pl.BlockSpec((tm, tk), lambda i, j, kk: (i, kk)),
                pl.BlockSpec((tk, tn), lambda i, j, kk: (kk, j)),
                pl.BlockSpec((1, tn), lambda i, j, kk: (0, j)),
            ],
            out_specs=pl.BlockSpec((tm, tn), lambda i, j, kk: (i, j)),
            scratch_shapes=[pltpu.VMEM((tm, tn), jnp.float32)],
        ),
        compiler_params=pltpu.CompilerParams(
            dimension_semantics=("parallel", "parallel", "arbitrary"),
        ),
        cost_estimate=pl.CostEstimate(
            flops=flops, transcendentals=0, bytes_accessed=bytes_accessed),
    )(x, y, bias)


def gcn_layer(a_hat_p, h_p, w_p, b_p, *, apply_relu, aggregate_first, out_dtype):
    """One GraphConv layer on padded/bf16 operands, staged into two matmuls."""
    if aggregate_first:
        # (A @ h) @ W : cheaper when the aggregation width (F_in) is the smaller side.
        zb = jnp.zeros((1, h_p.shape[1]), jnp.float32)
        ah = tiled_matmul(a_hat_p, h_p, zb, apply_relu=False, out_dtype=jnp.bfloat16)
        return tiled_matmul(ah, w_p, b_p, apply_relu=apply_relu, out_dtype=out_dtype)
    else:
        # A @ (h @ W) : cheaper (or equal) when F_out <= F_in.
        zb = jnp.zeros((1, w_p.shape[1]), jnp.float32)
        hw = tiled_matmul(h_p, w_p, zb, apply_relu=False, out_dtype=jnp.bfloat16)
        return tiled_matmul(a_hat_p, hw, b_p, apply_relu=apply_relu, out_dtype=out_dtype)


def gcn_forward(a_hats, features, params):
    """GCN.forward: stack of GraphConv layers, ReLU on all but the last."""
    n_nodes, in_feats = features.shape
    n_pad = _round_up(n_nodes, _LANE)
    n_layers = len(params)

    h = _pad2d(features, n_pad, _round_up(in_feats, _LANE)).astype(jnp.bfloat16)

    for i, (w, b) in enumerate(params):
        f_in, f_out = w.shape
        f_in_pad = _round_up(f_in, _LANE)
        f_out_pad = _round_up(f_out, _LANE)
        w_p = _pad2d(w, f_in_pad, f_out_pad).astype(jnp.bfloat16)
        b_p = _pad2d(b.reshape(1, -1), 1, f_out_pad).astype(jnp.float32)
        a_p = _pad2d(a_hats[i], n_pad, n_pad).astype(jnp.bfloat16)

        last = (i == n_layers - 1)
        # self.dropout(h) between layers: identity at inference.
        h = gcn_layer(
            a_p, h, w_p, b_p,
            apply_relu=not last,
            aggregate_first=(f_out > f_in),
            out_dtype=jnp.float32 if last else jnp.bfloat16,
        )

    n_classes = params[-1][0].shape[1]
    return h[:n_nodes, :n_classes]


def _glorot(key, shape):
    fan_in, fan_out = shape
    limit = jnp.sqrt(6.0 / (fan_in + fan_out))
    return jax.random.uniform(key, shape, jnp.float32, -limit, limit)


def _normalized_adjacency(key, n_nodes, p_edge=0.05):
    """Dense symmetric-normalized adjacency with self-loops (norm='both')."""
    a = jax.random.bernoulli(key, p_edge, (n_nodes, n_nodes)).astype(jnp.float32)
    a = jnp.maximum(a, a.T)                       # undirected
    a = a + jnp.eye(n_nodes, dtype=jnp.float32)   # self-loops -> no zero-degree issues
    deg = jnp.sum(a, axis=1)
    d_inv_sqrt = 1.0 / jnp.sqrt(deg)
    return a * d_inv_sqrt[:, None] * d_inv_sqrt[None, :]


if __name__ == "__main__":
    n_nodes = 256
    in_feats = 32
    n_hidden = 64
    n_classes = 8
    n_layers = 3          # in->hidden (relu), hidden->hidden (relu), hidden->classes

    key = jax.random.PRNGKey(0)
    k_feat, k_graph, *k_w = jax.random.split(key, 2 + n_layers)

    features = jax.random.normal(k_feat, (n_nodes, in_feats), jnp.float32)

    # One normalized adjacency per layer (dense stand-in for the per-layer DGL blocks).
    g_keys = jax.random.split(k_graph, n_layers)
    a_hats = [_normalized_adjacency(g_keys[i], n_nodes) for i in range(n_layers)]

    dims = [in_feats] + [n_hidden] * (n_layers - 1) + [n_classes]
    params = []
    for i in range(n_layers):
        w = _glorot(k_w[i], (dims[i], dims[i + 1]))
        b = jnp.zeros((dims[i + 1],), jnp.float32)
        params.append((w, b))

    out = gcn_forward(a_hats, features, params)
    out = jax.block_until_ready(out)

    # Pure-JAX f32 reference (loose tolerance: kernel matmul inputs are bf16).
    h_ref = features
    for i, (w, b) in enumerate(params):
        h_ref = a_hats[i] @ (h_ref @ w) + b
        if i != n_layers - 1:
            h_ref = jnp.maximum(h_ref, 0.0)

    assert out.shape == (n_nodes, n_classes)
    assert jnp.all(jnp.isfinite(out))
    max_err = float(jnp.max(jnp.abs(out - h_ref)))
    assert max_err < 1e-1, f"max abs error vs f32 reference: {max_err}"
    print("KERNEL_OK")
</pallas_src>

<mosaic_0001>
module attributes {stable_mosaic.version = 11 : i64} {
  func.func @_mm_kernel(%arg0: i32, %arg1: i32, %arg2: i32, %arg3: memref<256x256xbf16, #tpu.memory_space<vmem>>, %arg4: memref<256x128xbf16, #tpu.memory_space<vmem>>, %arg5: memref<1x128xf32, #tpu.memory_space<vmem>>, %arg6: memref<256x128xbf16, #tpu.memory_space<vmem>>, %arg7: memref<256x128xf32, #tpu.memory_space<vmem>>) attributes {dimension_semantics = [#tpu.dimension_semantics<parallel>, #tpu.dimension_semantics<parallel>, #tpu.dimension_semantics<arbitrary>], iteration_bounds = array<i64: 1, 1, 1>, scalar_prefetch = 0 : i64, scratch_operands = 1 : i64, tpu.core_type = #tpu.core_type<tc>, window_params = [{transform_indices = @transform_0, window_bounds = array<i64: 256, 256>}, {transform_indices = @transform_1, window_bounds = array<i64: 256, 128>}, {transform_indices = @transform_2, window_bounds = array<i64: 1, 128>}, {transform_indices = @transform_3, window_bounds = array<i64: 256, 128>}]} {
    %c0_i32 = arith.constant 0 : i32
    %0 = arith.cmpi eq, %arg2, %c0_i32 : i32
    %1 = arith.extui %0 : i1 to i32
    %c0_i32_0 = arith.constant 0 : i32
    %2 = arith.cmpi ne, %1, %c0_i32_0 : i32
    scf.if %2 {
      %cst_10 = arith.constant 0.000000e+00 : f32
      %12 = vector.broadcast %cst_10 : f32 to vector<256x128xf32>
      %c0_11 = arith.constant 0 : index
      %c0_12 = arith.constant 0 : index
      %13 = vector.load %arg7[%c0_11, %c0_12] : memref<256x128xf32, #tpu.memory_space<vmem>>, vector<256x128xf32>
      tpu.vector_store %arg7[%c0_11, %c0_12], %12 {strides = array<i32>} : memref<256x128xf32, #tpu.memory_space<vmem>>, vector<256x128xf32>,
    } else {
    }
    %c0 = arith.constant 0 : index
    %c0_1 = arith.constant 0 : index
    %3 = vector.load %arg7[%c0, %c0_1] : memref<256x128xf32, #tpu.memory_space<vmem>>, vector<256x128xf32>
    %c0_2 = arith.constant 0 : index
    %c0_3 = arith.constant 0 : index
    %4 = vector.load %arg3[%c0_2, %c0_3] : memref<256x256xbf16, #tpu.memory_space<vmem>>, vector<256x256xbf16>
    %c0_4 = arith.constant 0 : index
    %c0_5 = arith.constant 0 : index
    %5 = vector.load %arg4[%c0_4, %c0_5] : memref<256x128xbf16, #tpu.memory_space<vmem>>, vector<256x128xbf16>
    %cst = arith.constant dense<0.000000e+00> : vector<256x128xf32>
    %6 = tpu.matmul %4, %5, %cst {dimension_numbers = #tpu.dot_dimension_numbers<[1], [0], [0], [1], [0, 0, 1, 1], [], []>} : vector<256x256xbf16>, vector<256x128xbf16>, vector<256x128xf32> -> vector<256x128xf32>
    %7 = arith.addf %3, %6 : vector<256x128xf32>
    %c0_6 = arith.constant 0 : index
    %c0_7 = arith.constant 0 : index
    %8 = vector.load %arg7[%c0_6, %c0_7] : memref<256x128xf32, #tpu.memory_space<vmem>>, vector<256x128xf32>
    tpu.vector_store %arg7[%c0_6, %c0_7], %7 {strides = array<i32>} : memref<256x128xf32, #tpu.memory_space<vmem>>, vector<256x128xf32>,
    %c0_i32_8 = arith.constant 0 : i32
    %9 = arith.cmpi eq, %arg2, %c0_i32_8 : i32
    %10 = arith.extui %9 : i1 to i32
    %c0_i32_9 = arith.constant 0 : i32
    %11 = arith.cmpi ne, %10, %c0_i32_9 : i32
    scf.if %11 {
      %c0_10 = arith.constant 0 : index
      %c0_11 = arith.constant 0 : index
      %12 = vector.load %arg7[%c0_10, %c0_11] : memref<256x128xf32, #tpu.memory_space<vmem>>, vector<256x128xf32>
      %c0_12 = arith.constant 0 : index
      %c0_13 = arith.constant 0 : index
      %13 = vector.load %arg5[%c0_12, %c0_13] : memref<1x128xf32, #tpu.memory_space<vmem>>, vector<1x128xf32>
      %14 = vector.broadcast %13 : vector<1x128xf32> to vector<256x128xf32>
      %15 = arith.addf %12, %14 : vector<256x128xf32>
      %16 = arith.truncf %15 : vector<256x128xf32> to vector<256x128xbf16>
      %c0_14 = arith.constant 0 : index
      %c0_15 = arith.constant 0 : index
      %17 = vector.load %arg6[%c0_14, %c0_15] : memref<256x128xbf16, #tpu.memory_space<vmem>>, vector<256x128xbf16>
      tpu.vector_store %arg6[%c0_14, %c0_15], %16 {strides = array<i32>} : memref<256x128xbf16, #tpu.memory_space<vmem>>, vector<256x128xbf16>,
    } else {
    }
    return
  }
  func.func @transform_0(%arg0: i32, %arg1: i32, %arg2: i32) -> (i32, i32) {
    %c0_i32 = arith.constant 0 : i32
    return %arg0, %arg2 : i32, i32
  }
  func.func @transform_1(%arg0: i32, %arg1: i32, %arg2: i32) -> (i32, i32) {
    %c0_i32 = arith.constant 0 : i32
    return %arg2, %arg1 : i32, i32
  }
  func.func @transform_2(%arg0: i32, %arg1: i32, %arg2: i32) -> (i32, i32) {
    %c0_i32 = arith.constant 0 : i32
    %c0_i32_0 = arith.constant 0 : i32
    return %c0_i32, %arg1 : i32, i32
  }
  func.func @transform_3(%arg0: i32, %arg1: i32, %arg2: i32) -> (i32, i32) {
    %c0_i32 = arith.constant 0 : i32
    return %arg0, %arg1 : i32, i32
  }
}

</mosaic_0001>

<llo_original>
// kernel: tpu_custom_call.1
$region0: #{tpu_custom_call.1}
  #allocation0 [shape = 'u32[]', space=smem, size = 0x4, offset = 0x4, fixed_abs, tag = 'smem constant byte address 0x4 - core index']
  #allocation1 [shape = 'u32[144,128]{1,0:T(1,128)}', space=vmem, size = 0x12000, scoped, tag = 'internal scratch']
  #allocation2 [shape = 'f32[256,128]{1,0:T(8,128)}', space=vmem, size = 0x20000, scoped, tag = 'scratch operand']
  %s0 = inlined_call_operand.hbm [shape: bf16[256,256], index: 0, kind: input, shape index: {}]
  %s1 = inlined_call_operand.hbm [shape: bf16[256,128], index: 1, kind: input, shape index: {}]
  %s2 = inlined_call_operand.vmem [shape: f32[1,128], index: 2, kind: input, shape index: {}]
  %s3 = inlined_call_operand.hbm [shape: bf16[256,128], index: 3, kind: output, shape index: {}]
  %s4 = sld [smem:[#allocation0]]
  $region38: #{tpu_custom_call.1} parent=0
    _
  %s6 = ssub.s32 1, %s4
  %s7 = scalar_select 0, %s6, %s4
  $region1: #{tpu_custom_call.1} parent=0
    #allocation3 [shape = 'u8[131072]{0}', space=vmem, size = 0x20000, scoped, tag = 'input window, operand 0, single buffered']
    #allocation4 [shape = 's32[1]{0}', space=sflag, size = 0x4, scoped, tag = 'scoped memory for tpu_custom_call.1']
    #allocation5 [shape = 's32[1]{0}', space=sflag, size = 0x4, scoped, tag = 'scoped memory for tpu_custom_call.1']
    #allocation6 [shape = 'u8[65536]{0}', space=vmem, size = 0x10000, scoped, tag = 'input window, operand 1, single buffered']
    #allocation7 [shape = 's32[1]{0}', space=sflag, size = 0x4, scoped, tag = 'scoped memory for tpu_custom_call.1']
    #allocation8 [shape = 'u8[65536]{0}', space=vmem, size = 0x10000, scoped, tag = 'output window, operand 0, single buffered']
    %8 = vsyncpa [#allocation4], 0
    %9 = vsyncpa [#allocation7], 0
    %10 = vsyncpa [#allocation5], 0
    // Predicated region
    $region2: #{tpu_custom_call.1} parent=1 // pred_check
      _
    $region3: #{tpu_custom_call.1} parent=1 // pred_check_branch
      %12 = sbr.rel (0) target = $region5
    $region4: #{tpu_custom_call.1} parent=1 // pred_region
      %s14 = ssub.s32 4096, 4096
      %15 = vsyncadd [#allocation4], %s14
      %s16 = sshll.u32 [#allocation3], 4
      %s17 = int_to_ptr.vmem [resolvable:$true] %s16
      %22 = dma.hbm_to_vmem [thread:$0]  %s0, 4096, %s17, [#allocation4], 128, 128, 8
    $region5: #{tpu_custom_call.1} parent=1 // pred_fallthru
      _
    // Predicated region
    $region6: #{tpu_custom_call.1} parent=1 // pred_check
      _
    $region7: #{tpu_custom_call.1} parent=1 // pred_check_branch
      %24 = sbr.rel (0) target = $region9
    $region8: #{tpu_custom_call.1} parent=1 // pred_region
      %s26 = ssub.s32 2048, 2048
      %27 = vsyncadd [#allocation7], %s26
      %s28 = sshll.u32 [#allocation6], 4
      %s29 = int_to_ptr.vmem [resolvable:$true] %s28
      %34 = dma.hbm_to_vmem [thread:$0]  %s1, 2048, %s29, [#allocation7], 64, 64, 4
    $region9: #{tpu_custom_call.1} parent=1 // pred_fallthru
      _
    // Predicated region
    $region10: #{tpu_custom_call.1} parent=1 // pred_check
      _
    $region11: #{tpu_custom_call.1} parent=1 // pred_check_branch
      %36 = sbr.rel (0) target = $region13
    $region12: #{tpu_custom_call.1} parent=1 // pred_region
      _
    $region13: #{tpu_custom_call.1} parent=1 // pred_fallthru
      _
    // Predicated region
    $region14: #{tpu_custom_call.1} parent=1 // pred_check
      _
    $region15: #{tpu_custom_call.1} parent=1 // pred_check_branch
      %38 = sbr.rel (0) target = $region17
    $region16: #{tpu_custom_call.1} parent=1 // pred_region
      %39 = dma.done [#allocation4], 4096
    $region17: #{tpu_custom_call.1} parent=1 // pred_fallthru
      _
    // Predicated region
    $region18: #{tpu_custom_call.1} parent=1 // pred_check
      _
    $region19: #{tpu_custom_call.1} parent=1 // pred_check_branch
      %41 = sbr.rel (0) target = $region21
    $region20: #{tpu_custom_call.1} parent=1 // pred_region
      %42 = dma.done [#allocation7], 2048
    $region21: #{tpu_custom_call.1} parent=1 // pred_fallthru
      _
    %p44 = scmp.eq.s32.totalorder 0, 0
    // Predicated region
    $region22: #{tpu_custom_call.1} parent=1 // pred_check
      %p45 = pneg %p44
    $region23: #{tpu_custom_call.1} parent=1 // pred_check_branch
      %47 = sbr.rel (%p45) target = $region25
    $region24: #{tpu_custom_call.1} parent=1 // pred_region
      %48 = vst [vmem:[#allocation2] sm:$0xff] 0.0
      %49 = vst [vmem:[#allocation2 + $0x8] sm:$0xff] 0.0
      %50 = vst [vmem:[#allocation2 + $0x10] sm:$0xff] 0.0
      %51 = vst [vmem:[#allocation2 + $0x18] sm:$0xff] 0.0
      %52 = vst [vmem:[#allocation2 + $0x20] sm:$0xff] 0.0
      %53 = vst [vmem:[#allocation2 + $0x28] sm:$0xff] 0.0
      %54 = vst [vmem:[#allocation2 + $0x30] sm:$0xff] 0.0
      %55 = vst [vmem:[#allocation2 + $0x38] sm:$0xff] 0.0
      %56 = vst [vmem:[#allocation2 + $0x40] sm:$0xff] 0.0
      %57 = vst [vmem:[#allocation2 + $0x48] sm:$0xff] 0.0
      %58 = vst [vmem:[#allocation2 + $0x50] sm:$0xff] 0.0
      %59 = vst [vmem:[#allocation2 + $0x58] sm:$0xff] 0.0
      %60 = vst [vmem:[#allocation2 + $0x60] sm:$0xff] 0.0
      %61 = vst [vmem:[#allocation2 + $0x68] sm:$0xff] 0.0
      %62 = vst [vmem:[#allocation2 + $0x70] sm:$0xff] 0.0
      %63 = vst [vmem:[#allocation2 + $0x78] sm:$0xff] 0.0
      %64 = vst [vmem:[#allocation2 + $0x80] sm:$0xff] 0.0
      %65 = vst [vmem:[#allocation2 + $0x88] sm:$0xff] 0.0
      %66 = vst [vmem:[#allocation2 + $0x90] sm:$0xff] 0.0
      %67 = vst [vmem:[#allocation2 + $0x98] sm:$0xff] 0.0
      %68 = vst [vmem:[#allocation2 + $0xa0] sm:$0xff] 0.0
      %69 = vst [vmem:[#allocation2 + $0xa8] sm:$0xff] 0.0
      %70 = vst [vmem:[#allocation2 + $0xb0] sm:$0xff] 0.0
      %71 = vst [vmem:[#allocation2 + $0xb8] sm:$0xff] 0.0
      %72 = vst [vmem:[#allocation2 + $0xc0] sm:$0xff] 0.0
      %73 = vst [vmem:[#allocation2 + $0xc8] sm:$0xff] 0.0
      %74 = vst [vmem:[#allocation2 + $0xd0] sm:$0xff] 0.0
      %75 = vst [vmem:[#allocation2 + $0xd8] sm:$0xff] 0.0
      %76 = vst [vmem:[#allocation2 + $0xe0] sm:$0xff] 0.0
      %77 = vst [vmem:[#allocation2 + $0xe8] sm:$0xff] 0.0
      %78 = vst [vmem:[#allocation2 + $0xf0] sm:$0xff] 0.0
      %79 = vst [vmem:[#allocation2 + $0xf8] sm:$0xff] 0.0
    $region25: #{tpu_custom_call.1} parent=1 // pred_fallthru
      _
    %v80 = vld [vmem:[#allocation2] sm:$0xff]
    %v81 = vld [vmem:[#allocation2 + $0x8] sm:$0xff]
    %v82 = vld [vmem:[#allocation2 + $0x10] sm:$0xff]
    %v83 = vld [vmem:[#allocation2 + $0x18] sm:$0xff]
    %v84 = vld [vmem:[#allocation2 + $0x20] sm:$0xff]
    %v85 = vld [vmem:[#allocation2 + $0x28] sm:$0xff]
    %v86 = vld [vmem:[#allocation2 + $0x30] sm:$0xff]
    %v87 = vld [vmem:[#allocation2 + $0x38] sm:$0xff]
    %v88 = vld [vmem:[#allocation2 + $0x40] sm:$0xff]
    %v89 = vld [vmem:[#allocation2 + $0x48] sm:$0xff]
    %v90 = vld [vmem:[#allocation2 + $0x50] sm:$0xff]
    %v91 = vld [vmem:[#allocation2 + $0x58] sm:$0xff]
    %v92 = vld [vmem:[#allocation2 + $0x60] sm:$0xff]
    %v93 = vld [vmem:[#allocation2 + $0x68] sm:$0xff]
    %v94 = vld [vmem:[#allocation2 + $0x70] sm:$0xff]
    %v95 = vld [vmem:[#allocation2 + $0x78] sm:$0xff]
    %v96 = vld [vmem:[#allocation2 + $0x80] sm:$0xff]
    %v97 = vld [vmem:[#allocation2 + $0x88] sm:$0xff]
    %v98 = vld [vmem:[#allocation2 + $0x90] sm:$0xff]
    %v99 = vld [vmem:[#allocation2 + $0x98] sm:$0xff]
    %v100 = vld [vmem:[#allocation2 + $0xa0] sm:$0xff]
    %v101 = vld [vmem:[#allocation2 + $0xa8] sm:$0xff]
    %v102 = vld [vmem:[#allocation2 + $0xb0] sm:$0xff]
    %v103 = vld [vmem:[#allocation2 + $0xb8] sm:$0xff]
    %v104 = vld [vmem:[#allocation2 + $0xc0] sm:$0xff]
    %v105 = vld [vmem:[#allocation2 + $0xc8] sm:$0xff]
    %v106 = vld [vmem:[#allocation2 + $0xd0] sm:$0xff]
    %v107 = vld [vmem:[#allocation2 + $0xd8] sm:$0xff]
    %v108 = vld [vmem:[#allocation2 + $0xe0] sm:$0xff]
    %v109 = vld [vmem:[#allocation2 + $0xe8] sm:$0xff]
    %v110 = vld [vmem:[#allocation2 + $0xf0] sm:$0xff]
    %v111 = vld [vmem:[#allocation2 + $0xf8] sm:$0xff]
    %v112 = vld [vmem:[#allocation3] sm:$0xff]
    %v113 = vld [vmem:[#allocation3 + $0x8] sm:$0xff]
    %v114 = vld [vmem:[#allocation3 + $0x10] sm:$0xff]
    %v115 = vld [vmem:[#allocation3 + $0x18] sm:$0xff]
    %v116 = vld [vmem:[#allocation3 + $0x20] sm:$0xff]
    %v117 = vld [vmem:[#allocation3 + $0x28] sm:$0xff]
    %v118 = vld [vmem:[#allocation3 + $0x30] sm:$0xff]
    %v119 = vld [vmem:[#allocation3 + $0x38] sm:$0xff]
    %v120 = vld [vmem:[#allocation3 + $0x40] sm:$0xff]
    %v121 = vld [vmem:[#allocation3 + $0x48] sm:$0xff]
    %v122 = vld [vmem:[#allocation3 + $0x50] sm:$0xff]
    %v123 = vld [vmem:[#allocation3 + $0x58] sm:$0xff]
    %v124 = vld [vmem:[#allocation3 + $0x60] sm:$0xff]
    %v125 = vld [vmem:[#allocation3 + $0x68] sm:$0xff]
    %v126 = vld [vmem:[#allocation3 + $0x70] sm:$0xff]
    %v127 = vld [vmem:[#allocation3 + $0x78] sm:$0xff]
    %v128 = vld [vmem:[#allocation3 + $0x80] sm:$0xff]
    %v129 = vld [vmem:[#allocation3 + $0x88] sm:$0xff]
    %v130 = vld [vmem:[#allocation3 + $0x90] sm:$0xff]
    %v131 = vld [vmem:[#allocation3 + $0x98] sm:$0xff]
    %v132 = vld [vmem:[#allocation3 + $0xa0] sm:$0xff]
    %v133 = vld [vmem:[#allocation3 + $0xa8] sm:$0xff]
    %v134 = vld [vmem:[#allocation3 + $0xb0] sm:$0xff]
    %v135 = vld [vmem:[#allocation3 + $0xb8] sm:$0xff]
    %v136 = vld [vmem:[#allocation3 + $0xc0] sm:$0xff]
    %v137 = vld [vmem:[#allocation3 + $0xc8] sm:$0xff]
    %v138 = vld [vmem:[#allocation3 + $0xd0] sm:$0xff]
    %v139 = vld [vmem:[#allocation3 + $0xd8] sm:$0xff]
    %v140 = vld [vmem:[#allocation3 + $0xe0] sm:$0xff]
    %v141 = vld [vmem:[#allocation3 + $0xe8] sm:$0xff]
    %v142 = vld [vmem:[#allocation3 + $0xf0] sm:$0xff]
    %v143 = vld [vmem:[#allocation3 + $0xf8] sm:$0xff]
    %v144 = vld [vmem:[#allocation6] sm:$0xf]
    %v145 = vld [vmem:[#allocation6 + $0x4] sm:$0xf]
    %v146 = vld [vmem:[#allocation6 + $0x8] sm:$0xf]
    %v147 = vld [vmem:[#allocation6 + $0xc] sm:$0xf]
    %v148 = vld [vmem:[#allocation6 + $0x10] sm:$0xf]
    %v149 = vld [vmem:[#allocation6 + $0x14] sm:$0xf]
    %v150 = vld [vmem:[#allocation6 + $0x18] sm:$0xf]
    %v151 = vld [vmem:[#allocation6 + $0x1c] sm:$0xf]
    %v152 = vld [vmem:[#allocation6 + $0x20] sm:$0xf]
    %v153 = vld [vmem:[#allocation6 + $0x24] sm:$0xf]
    %v154 = vld [vmem:[#allocation6 + $0x28] sm:$0xf]
    %v155 = vld [vmem:[#allocation6 + $0x2c] sm:$0xf]
    %v156 = vld [vmem:[#allocation6 + $0x30] sm:$0xf]
    %v157 = vld [vmem:[#allocation6 + $0x34] sm:$0xf]
    %v158 = vld [vmem:[#allocation6 + $0x38] sm:$0xf]
    %v159 = vld [vmem:[#allocation6 + $0x3c] sm:$0xf]
    %v160 = vld [vmem:[#allocation6 + $0x40] sm:$0xf]
    %v161 = vld [vmem:[#allocation6 + $0x44] sm:$0xf]
    %v162 = vld [vmem:[#allocation6 + $0x48] sm:$0xf]
    %v163 = vld [vmem:[#allocation6 + $0x4c] sm:$0xf]
    %v164 = vld [vmem:[#allocation6 + $0x50] sm:$0xf]
    %v165 = vld [vmem:[#allocation6 + $0x54] sm:$0xf]
    %v166 = vld [vmem:[#allocation6 + $0x58] sm:$0xf]
    %v167 = vld [vmem:[#allocation6 + $0x5c] sm:$0xf]
    %v168 = vld [vmem:[#allocation6 + $0x60] sm:$0xf]
    %v169 = vld [vmem:[#allocation6 + $0x64] sm:$0xf]
    %v170 = vld [vmem:[#allocation6 + $0x68] sm:$0xf]
    %v171 = vld [vmem:[#allocation6 + $0x6c] sm:$0xf]
    %v172 = vld [vmem:[#allocation6 + $0x70] sm:$0xf]
    %v173 = vld [vmem:[#allocation6 + $0x74] sm:$0xf]
    %v174 = vld [vmem:[#allocation6 + $0x78] sm:$0xf]
    %v175 = vld [vmem:[#allocation6 + $0x7c] sm:$0xf]
    %v208 = vunpack.c.l.b16 %v112
    %v209 = vunpack.c.h.b16 %v112
    %v210 = vunpack.c.l.b16 %v113
    %v211 = vunpack.c.h.b16 %v113
    %v212 = vunpack.c.l.b16 %v114
    %v213 = vunpack.c.h.b16 %v114
    %v214 = vunpack.c.l.b16 %v115
    %v215 = vunpack.c.h.b16 %v115
    %v216 = vunpack.c.l.b16 %v116
    %v217 = vunpack.c.h.b16 %v116
    %v218 = vunpack.c.l.b16 %v117
    %v219 = vunpack.c.h.b16 %v117
    %v220 = vunpack.c.l.b16 %v118
    %v221 = vunpack.c.h.b16 %v118
    %v222 = vunpack.c.l.b16 %v119
    %v223 = vunpack.c.h.b16 %v119
    %v224 = vunpack.c.l.b16 %v120
    %v225 = vunpack.c.h.b16 %v120
    %v226 = vunpack.c.l.b16 %v121
    %v227 = vunpack.c.h.b16 %v121
    %v228 = vunpack.c.l.b16 %v122
    %v229 = vunpack.c.h.b16 %v122
    %v230 = vunpack.c.l.b16 %v123
    %v231 = vunpack.c.h.b16 %v123
    %v232 = vunpack.c.l.b16 %v124
    %v233 = vunpack.c.h.b16 %v124
    %v234 = vunpack.c.l.b16 %v125
    %v235 = vunpack.c.h.b16 %v125
    %v236 = vunpack.c.l.b16 %v126
    %v237 = vunpack.c.h.b16 %v126
    %v238 = vunpack.c.l.b16 %v127
    %v239 = vunpack.c.h.b16 %v127
    %v240 = vunpack.c.l.b16 %v128
    %v241 = vunpack.c.h.b16 %v128
    %v242 = vunpack.c.l.b16 %v129
    %v243 = vunpack.c.h.b16 %v129
    %v244 = vunpack.c.l.b16 %v130
    %v245 = vunpack.c.h.b16 %v130
    %v246 = vunpack.c.l.b16 %v131
    %v247 = vunpack.c.h.b16 %v131
    %v248 = vunpack.c.l.b16 %v132
    %v249 = vunpack.c.h.b16 %v132
    %v250 = vunpack.c.l.b16 %v133
    %v251 = vunpack.c.h.b16 %v133
    %v252 = vunpack.c.l.b16 %v134
    %v253 = vunpack.c.h.b16 %v134
    %v254 = vunpack.c.l.b16 %v135
    %v255 = vunpack.c.h.b16 %v135
    %v256 = vunpack.c.l.b16 %v136
    %v257 = vunpack.c.h.b16 %v136
    %v258 = vunpack.c.l.b16 %v137
    %v259 = vunpack.c.h.b16 %v137
    %v260 = vunpack.c.l.b16 %v138
    %v261 = vunpack.c.h.b16 %v138
    %v262 = vunpack.c.l.b16 %v139
    %v263 = vunpack.c.h.b16 %v139
    %v264 = vunpack.c.l.b16 %v140
    %v265 = vunpack.c.h.b16 %v140
    %v266 = vunpack.c.l.b16 %v141
    %v267 = vunpack.c.h.b16 %v141
    %v268 = vunpack.c.l.b16 %v142
    %v269 = vunpack.c.h.b16 %v142
    %v270 = vunpack.c.l.b16 %v143
    %v271 = vunpack.c.h.b16 %v143
    %v272 = vpack.c.b16 %v210, %v208
    %v273 = vpack.c.b16 %v211, %v209
    %v274 = vpack.c.b16 %v214, %v212
    %v275 = vpack.c.b16 %v215, %v213
    %v276 = vpack.c.b16 %v218, %v216
    %v277 = vpack.c.b16 %v219, %v217
    %v278 = vpack.c.b16 %v222, %v220
    %v279 = vpack.c.b16 %v223, %v221
    %v280 = vpack.c.b16 %v226, %v224
    %v281 = vpack.c.b16 %v227, %v225
    %v282 = vpack.c.b16 %v230, %v228
    %v283 = vpack.c.b16 %v231, %v229
    %v284 = vpack.c.b16 %v234, %v232
    %v285 = vpack.c.b16 %v235, %v233
    %v286 = vpack.c.b16 %v238, %v236
    %v287 = vpack.c.b16 %v239, %v237
    %v288 = vpack.c.b16 %v242, %v240
    %v289 = vpack.c.b16 %v243, %v241
    %v290 = vpack.c.b16 %v246, %v244
    %v291 = vpack.c.b16 %v247, %v245
    %v292 = vpack.c.b16 %v250, %v248
    %v293 = vpack.c.b16 %v251, %v249
    %v294 = vpack.c.b16 %v254, %v252
    %v295 = vpack.c.b16 %v255, %v253
    %v296 = vpack.c.b16 %v258, %v256
    %v297 = vpack.c.b16 %v259, %v257
    %v298 = vpack.c.b16 %v262, %v260
    %v299 = vpack.c.b16 %v263, %v261
    %v300 = vpack.c.b16 %v266, %v264
    %v301 = vpack.c.b16 %v267, %v265
    %v302 = vpack.c.b16 %v270, %v268
    %v303 = vpack.c.b16 %v271, %v269
    %v368 = vunpack.c.l.b16 %v144
    %v369 = vunpack.c.l.b16 %v145
    %v370 = vunpack.c.l.b16 %v146
    %v371 = vunpack.c.l.b16 %v147
    %v372 = vunpack.c.l.b16 %v148
    %v373 = vunpack.c.l.b16 %v149
    %v374 = vunpack.c.l.b16 %v150
    %v375 = vunpack.c.l.b16 %v151
    %v376 = vunpack.c.l.b16 %v152
    %v377 = vunpack.c.l.b16 %v153
    %v378 = vunpack.c.l.b16 %v154
    %v379 = vunpack.c.l.b16 %v155
    %v380 = vunpack.c.l.b16 %v156
    %v381 = vunpack.c.l.b16 %v157
    %v382 = vunpack.c.l.b16 %v158
    %v383 = vunpack.c.l.b16 %v159
    %v384 = vunpack.c.l.b16 %v160
    %v385 = vunpack.c.l.b16 %v161
    %v386 = vunpack.c.l.b16 %v162
    %v387 = vunpack.c.l.b16 %v163
    %v388 = vunpack.c.l.b16 %v164
    %v389 = vunpack.c.l.b16 %v165
    %v390 = vunpack.c.l.b16 %v166
    %v391 = vunpack.c.l.b16 %v167
    %v392 = vunpack.c.l.b16 %v168
    %v393 = vunpack.c.l.b16 %v169
    %v394 = vunpack.c.l.b16 %v170
    %v395 = vunpack.c.l.b16 %v171
    %v396 = vunpack.c.l.b16 %v172
    %v397 = vunpack.c.l.b16 %v173
    %v398 = vunpack.c.l.b16 %v174
    %v399 = vunpack.c.l.b16 %v175
    %v400 = vpack.c.b16 %v369, %v368
    %v401 = vpack.c.b16 %v371, %v370
    %v402 = vpack.c.b16 %v373, %v372
    %v403 = vpack.c.b16 %v375, %v374
    %v404 = vpack.c.b16 %v377, %v376
    %v405 = vpack.c.b16 %v379, %v378
    %v406 = vpack.c.b16 %v381, %v380
    %v407 = vpack.c.b16 %v383, %v382
    %v408 = vpack.c.b16 %v385, %v384
    %v409 = vpack.c.b16 %v387, %v386
    %v410 = vpack.c.b16 %v389, %v388
    %v411 = vpack.c.b16 %v391, %v390
    %v412 = vpack.c.b16 %v393, %v392
    %v413 = vpack.c.b16 %v395, %v394
    %v414 = vpack.c.b16 %v397, %v396
    %v415 = vpack.c.b16 %v399, %v398
    %432 = vmatprep.subr.bf16.mxu0 0
    %433 = vmatpush1.bf16.msra.mxu0 %v407
    %434 = vmatprep.subr.bf16.mxu0 0
    %435 = vmatpush1.bf16.msra.mxu0 %v406
    %436 = vmatprep.subr.bf16.mxu0 0
    %437 = vmatpush1.bf16.msra.mxu0 %v405
    %438 = vmatprep.subr.bf16.mxu0 0
    %439 = vmatpush1.bf16.msra.mxu0 %v404
    %440 = vmatprep.subr.bf16.mxu0 0
    %441 = vmatpush1.bf16.msra.mxu0 %v403
    %442 = vmatprep.subr.bf16.mxu0 0
    %443 = vmatpush1.bf16.msra.mxu0 %v402
    %444 = vmatprep.subr.bf16.mxu0 0
    %445 = vmatpush1.bf16.msra.mxu0 %v401
    %446 = vmatprep.subr.bf16.mxu0 0
    %447 = vmatpush1.bf16.msra.mxu0 %v400
    %448 = vmatprep.subr.bf16.mxu0 0
    %449 = vmatpush2.bf16.msra.mxu0 %v415
    %450 = vmatprep.subr.bf16.mxu0 0
    %451 = vmatpush2.bf16.msra.mxu0 %v414
    %452 = vmatprep.subr.bf16.mxu0 0
    %453 = vmatpush2.bf16.msra.mxu0 %v413
    %454 = vmatprep.subr.bf16.mxu0 0
    %455 = vmatpush2.bf16.msra.mxu0 %v412
    %456 = vmatprep.subr.bf16.mxu0 0
    %457 = vmatpush2.bf16.msra.mxu0 %v411
    %458 = vmatprep.subr.bf16.mxu0 0
    %459 = vmatpush2.bf16.msra.mxu0 %v410
    %460 = vmatprep.subr.bf16.mxu0 0
    %461 = vmatpush2.bf16.msra.mxu0 %v409
    %462 = vmatprep.subr.bf16.mxu0 0
    %463 = vmatpush2.bf16.msra.mxu0 %v408
    %464 = vmatprep.mubr.bf16.mxu0 %v273
    %465 = vmatmul.mubr.bf16.gmra.mxu0 %v272
    %v466 = vpop.f32.mrf.mxu0
    %v467 = vadd.f32 0.0, %v466
    %v468 = vpop.f32.mrf.mxu0
    %v469 = vpop.f32.mrf.mxu0
    %v470 = vadd.f32 0.0, %v469
    %v471 = vpop.f32.mrf.mxu0
    %472 = vmatprep.mubr.bf16.mxu0 %v275
    %473 = vmatmul.mubr.bf16.gmra.mxu0 %v274
    %v474 = vpop.f32.mrf.mxu0
    %v475 = vadd.f32 0.0, %v474
    %v476 = vpop.f32.mrf.mxu0
    %v477 = vpop.f32.mrf.mxu0
    %v478 = vadd.f32 0.0, %v477
    %v479 = vpop.f32.mrf.mxu0
    %480 = vmatprep.mubr.bf16.mxu0 %v277
    %481 = vmatmul.mubr.bf16.gmra.mxu0 %v276
    %v482 = vpop.f32.mrf.mxu0
    %v483 = vadd.f32 0.0, %v482
    %v484 = vpop.f32.mrf.mxu0
    %v485 = vpop.f32.mrf.mxu0
    %v486 = vadd.f32 0.0, %v485
    %v487 = vpop.f32.mrf.mxu0
    %488 = vmatprep.mubr.bf16.mxu0 %v279
    %489 = vmatmul.mubr.bf16.gmra.mxu0 %v278
    %v490 = vpop.f32.mrf.mxu0
    %v491 = vadd.f32 0.0, %v490
    %v492 = vpop.f32.mrf.mxu0
    %v493 = vpop.f32.mrf.mxu0
    %v494 = vadd.f32 0.0, %v493
    %v495 = vpop.f32.mrf.mxu0
    %496 = vmatprep.mubr.bf16.mxu0 %v281
    %497 = vmatmul.mubr.bf16.gmra.mxu0 %v280
    %v498 = vpop.f32.mrf.mxu0
    %v499 = vadd.f32 0.0, %v498
    %v500 = vpop.f32.mrf.mxu0
    %v501 = vpop.f32.mrf.mxu0
    %v502 = vadd.f32 0.0, %v501
    %v503 = vpop.f32.mrf.mxu0
    %504 = vmatprep.mubr.bf16.mxu0 %v283
    %505 = vmatmul.mubr.bf16.gmra.mxu0 %v282
    %v506 = vpop.f32.mrf.mxu0
    %v507 = vadd.f32 0.0, %v506
    %v508 = vpop.f32.mrf.mxu0
    %v509 = vpop.f32.mrf.mxu0
    %v510 = vadd.f32 0.0, %v509
    %v511 = vpop.f32.mrf.mxu0
    %512 = vmatprep.mubr.bf16.mxu0 %v285
    %513 = vmatmul.mubr.bf16.gmra.mxu0 %v284
    %v514 = vpop.f32.mrf.mxu0
    %v515 = vadd.f32 0.0, %v514
    %v516 = vpop.f32.mrf.mxu0
    %v517 = vpop.f32.mrf.mxu0
    %v518 = vadd.f32 0.0, %v517
    %v519 = vpop.f32.mrf.mxu0
    %520 = vmatprep.mubr.bf16.mxu0 %v287
    %521 = vmatmul.mubr.bf16.gmra.mxu0 %v286
    %v522 = vpop.f32.mrf.mxu0
    %v523 = vadd.f32 0.0, %v522
    %v524 = vpop.f32.mrf.mxu0
    %v525 = vpop.f32.mrf.mxu0
    %v526 = vadd.f32 0.0, %v525
    %v527 = vpop.f32.mrf.mxu0
    %528 = vmatprep.mubr.bf16.mxu0 %v289
    %529 = vmatmul.mubr.bf16.gmra.mxu0 %v288
    %v530 = vpop.f32.mrf.mxu0
    %v531 = vadd.f32 0.0, %v530
    %v532 = vpop.f32.mrf.mxu0
    %v533 = vpop.f32.mrf.mxu0
    %v534 = vadd.f32 0.0, %v533
    %v535 = vpop.f32.mrf.mxu0
    %536 = vmatprep.mubr.bf16.mxu0 %v291
    %537 = vmatmul.mubr.bf16.gmra.mxu0 %v290
    %v538 = vpop.f32.mrf.mxu0
    %v539 = vadd.f32 0.0, %v538
    %v540 = vpop.f32.mrf.mxu0
    %v541 = vpop.f32.mrf.mxu0
    %v542 = vadd.f32 0.0, %v541
    %v543 = vpop.f32.mrf.mxu0
    %544 = vmatprep.mubr.bf16.mxu0 %v293
    %545 = vmatmul.mubr.bf16.gmra.mxu0 %v292
    %v546 = vpop.f32.mrf.mxu0
    %v547 = vadd.f32 0.0, %v546
    %v548 = vpop.f32.mrf.mxu0
    %v549 = vpop.f32.mrf.mxu0
    %v550 = vadd.f32 0.0, %v549
    %v551 = vpop.f32.mrf.mxu0
    %552 = vmatprep.mubr.bf16.mxu0 %v295
    %553 = vmatmul.mubr.bf16.gmra.mxu0 %v294
    %v554 = vpop.f32.mrf.mxu0
    %v555 = vadd.f32 0.0, %v554
    %v556 = vpop.f32.mrf.mxu0
    %v557 = vpop.f32.mrf.mxu0
    %v558 = vadd.f32 0.0, %v557
    %v559 = vpop.f32.mrf.mxu0
    %560 = vmatprep.mubr.bf16.mxu0 %v297
    %561 = vmatmul.mubr.bf16.gmra.mxu0 %v296
    %v562 = vpop.f32.mrf.mxu0
    %v563 = vadd.f32 0.0, %v562
    %v564 = vpop.f32.mrf.mxu0
    %v565 = vpop.f32.mrf.mxu0
    %v566 = vadd.f32 0.0, %v565
    %v567 = vpop.f32.mrf.mxu0
    %568 = vmatprep.mubr.bf16.mxu0 %v299
    %569 = vmatmul.mubr.bf16.gmra.mxu0 %v298
    %v570 = vpop.f32.mrf.mxu0
    %v571 = vadd.f32 0.0, %v570
    %v572 = vpop.f32.mrf.mxu0
    %v573 = vpop.f32.mrf.mxu0
    %v574 = vadd.f32 0.0, %v573
    %v575 = vpop.f32.mrf.mxu0
    %576 = vmatprep.mubr.bf16.mxu0 %v301
    %577 = vmatmul.mubr.bf16.gmra.mxu0 %v300
    %v578 = vpop.f32.mrf.mxu0
    %v579 = vadd.f32 0.0, %v578
    %v580 = vpop.f32.mrf.mxu0
    %v581 = vpop.f32.mrf.mxu0
    %v582 = vadd.f32 0.0, %v581
    %v583 = vpop.f32.mrf.mxu0
    %584 = vmatprep.mubr.bf16.mxu0 %v303
    %585 = vmatmul.mubr.bf16.gmra.mxu0 %v302
    %v586 = vpop.f32.mrf.mxu0
    %v587 = vadd.f32 0.0, %v586
    %v588 = vpop.f32.mrf.mxu0
    %v589 = vpop.f32.mrf.mxu0
    %v590 = vadd.f32 0.0, %v589
    %v591 = vpop.f32.mrf.mxu0
    %592 = vdwg.mxu0
    %v593 = vadd.f32 %v80, %v467
    %v594 = vadd.f32 %v81, %v470
    %v595 = vadd.f32 %v82, %v475
    %v596 = vadd.f32 %v83, %v478
    %v597 = vadd.f32 %v84, %v483
    %v598 = vadd.f32 %v85, %v486
    %v599 = vadd.f32 %v86, %v491
    %v600 = vadd.f32 %v87, %v494
    %v601 = vadd.f32 %v88, %v499
    %v602 = vadd.f32 %v89, %v502
    %v603 = vadd.f32 %v90, %v507
    %v604 = vadd.f32 %v91, %v510
    %v605 = vadd.f32 %v92, %v515
    %v606 = vadd.f32 %v93, %v518
    %v607 = vadd.f32 %v94, %v523
    %v608 = vadd.f32 %v95, %v526
    %v609 = vadd.f32 %v96, %v531
    %v610 = vadd.f32 %v97, %v534
    %v611 = vadd.f32 %v98, %v539
    %v612 = vadd.f32 %v99, %v542
    %v613 = vadd.f32 %v100, %v547
    %v614 = vadd.f32 %v101, %v550
    %v615 = vadd.f32 %v102, %v555
    %v616 = vadd.f32 %v103, %v558
    %v617 = vadd.f32 %v104, %v563
    %v618 = vadd.f32 %v105, %v566
    %v619 = vadd.f32 %v106, %v571
    %v620 = vadd.f32 %v107, %v574
    %v621 = vadd.f32 %v108, %v579
    %v622 = vadd.f32 %v109, %v582
    %v623 = vadd.f32 %v110, %v587
    %v624 = vadd.f32 %v111, %v590
    %625 = vst [vmem:[#allocation2] sm:$0xff] %v593
    %626 = vst [vmem:[#allocation2 + $0x8] sm:$0xff] %v594
    %627 = vst [vmem:[#allocation2 + $0x10] sm:$0xff] %v595
    %628 = vst [vmem:[#allocation2 + $0x18] sm:$0xff] %v596
    %629 = vst [vmem:[#allocation2 + $0x20] sm:$0xff] %v597
    %630 = vst [vmem:[#allocation2 + $0x28] sm:$0xff] %v598
    %631 = vst [vmem:[#allocation2 + $0x30] sm:$0xff] %v599
    %632 = vst [vmem:[#allocation2 + $0x38] sm:$0xff] %v600
    %633 = vst [vmem:[#allocation2 + $0x40] sm:$0xff] %v601
    %634 = vst [vmem:[#allocation2 + $0x48] sm:$0xff] %v602
    %635 = vst [vmem:[#allocation2 + $0x50] sm:$0xff] %v603
    %636 = vst [vmem:[#allocation2 + $0x58] sm:$0xff] %v604
    %637 = vst [vmem:[#allocation2 + $0x60] sm:$0xff] %v605
    %638 = vst [vmem:[#allocation2 + $0x68] sm:$0xff] %v606
    %639 = vst [vmem:[#allocation2 + $0x70] sm:$0xff] %v607
    %640 = vst [vmem:[#allocation2 + $0x78] sm:$0xff] %v608
    %641 = vst [vmem:[#allocation2 + $0x80] sm:$0xff] %v609
    %642 = vst [vmem:[#allocation2 + $0x88] sm:$0xff] %v610
    %643 = vst [vmem:[#allocation2 + $0x90] sm:$0xff] %v611
    %644 = vst [vmem:[#allocation2 + $0x98] sm:$0xff] %v612
    %645 = vst [vmem:[#allocation2 + $0xa0] sm:$0xff] %v613
    %646 = vst [vmem:[#allocation2 + $0xa8] sm:$0xff] %v614
    %647 = vst [vmem:[#allocation2 + $0xb0] sm:$0xff] %v615
    %648 = vst [vmem:[#allocation2 + $0xb8] sm:$0xff] %v616
    %649 = vst [vmem:[#allocation2 + $0xc0] sm:$0xff] %v617
    %650 = vst [vmem:[#allocation2 + $0xc8] sm:$0xff] %v618
    %651 = vst [vmem:[#allocation2 + $0xd0] sm:$0xff] %v619
    %652 = vst [vmem:[#allocation2 + $0xd8] sm:$0xff] %v620
    %653 = vst [vmem:[#allocation2 + $0xe0] sm:$0xff] %v621
    %654 = vst [vmem:[#allocation2 + $0xe8] sm:$0xff] %v622
    %655 = vst [vmem:[#allocation2 + $0xf0] sm:$0xff] %v623
    %656 = vst [vmem:[#allocation2 + $0xf8] sm:$0xff] %v624
    // Predicated region
    $region26: #{tpu_custom_call.1} parent=1 // pred_check
      %p657 = pneg %p44
    $region27: #{tpu_custom_call.1} parent=1 // pred_check_branch
      %659 = sbr.rel (%p657) target = $region29
    $region28: #{tpu_custom_call.1} parent=1 // pred_region
      %v660 = vld [vmem:[#allocation2] sm:$0xff]
      %v661 = vld [vmem:[#allocation2 + $0x8] sm:$0xff]
      %v662 = vld [vmem:[#allocation2 + $0x10] sm:$0xff]
      %v663 = vld [vmem:[#allocation2 + $0x18] sm:$0xff]
      %v664 = vld [vmem:[#allocation2 + $0x20] sm:$0xff]
      %v665 = vld [vmem:[#allocation2 + $0x28] sm:$0xff]
      %v666 = vld [vmem:[#allocation2 + $0x30] sm:$0xff]
      %v667 = vld [vmem:[#allocation2 + $0x38] sm:$0xff]
      %v668 = vld [vmem:[#allocation2 + $0x40] sm:$0xff]
      %v669 = vld [vmem:[#allocation2 + $0x48] sm:$0xff]
      %v670 = vld [vmem:[#allocation2 + $0x50] sm:$0xff]
      %v671 = vld [vmem:[#allocation2 + $0x58] sm:$0xff]
      %v672 = vld [vmem:[#allocation2 + $0x60] sm:$0xff]
      %v673 = vld [vmem:[#allocation2 + $0x68] sm:$0xff]
      %v674 = vld [vmem:[#allocation2 + $0x70] sm:$0xff]
      %v675 = vld [vmem:[#allocation2 + $0x78] sm:$0xff]
      %v676 = vld [vmem:[#allocation2 + $0x80] sm:$0xff]
      %v677 = vld [vmem:[#allocation2 + $0x88] sm:$0xff]
      %v678 = vld [vmem:[#allocation2 + $0x90] sm:$0xff]
      %v679 = vld [vmem:[#allocation2 + $0x98] sm:$0xff]
      %v680 = vld [vmem:[#allocation2 + $0xa0] sm:$0xff]
      %v681 = vld [vmem:[#allocation2 + $0xa8] sm:$0xff]
      %v682 = vld [vmem:[#allocation2 + $0xb0] sm:$0xff]
      %v683 = vld [vmem:[#allocation2 + $0xb8] sm:$0xff]
      %v684 = vld [vmem:[#allocation2 + $0xc0] sm:$0xff]
      %v685 = vld [vmem:[#allocation2 + $0xc8] sm:$0xff]
      %v686 = vld [vmem:[#allocation2 + $0xd0] sm:$0xff]
      %v687 = vld [vmem:[#allocation2 + $0xd8] sm:$0xff]
      %v688 = vld [vmem:[#allocation2 + $0xe0] sm:$0xff]
      %v689 = vld [vmem:[#allocation2 + $0xe8] sm:$0xff]
      %v690 = vld [vmem:[#allocation2 + $0xf0] sm:$0xff]
      %v691 = vld [vmem:[#allocation2 + $0xf8] sm:$0xff]
      %v692 = vld [vmem:[%s2] sm:$0x1]
      %v694 = vlaneseq
      %v695 = vshrl.u32 %v694, 7
      %v696 = vsub.s32 0, %v695
      %v697 = vrot.slane %v692, %v696
      %v699 = vadd.f32 %v660, %v697
      %v700 = vadd.f32 %v661, %v697
      %v701 = vadd.f32 %v662, %v697
      %v702 = vadd.f32 %v663, %v697
      %v703 = vadd.f32 %v664, %v697
      %v704 = vadd.f32 %v665, %v697
      %v705 = vadd.f32 %v666, %v697
      %v706 = vadd.f32 %v667, %v697
      %v707 = vadd.f32 %v668, %v697
      %v708 = vadd.f32 %v669, %v697
      %v709 = vadd.f32 %v670, %v697
      %v710 = vadd.f32 %v671, %v697
      %v711 = vadd.f32 %v672, %v697
      %v712 = vadd.f32 %v673, %v697
      %v713 = vadd.f32 %v674, %v697
      %v714 = vadd.f32 %v675, %v697
      %v715 = vadd.f32 %v676, %v697
      %v716 = vadd.f32 %v677, %v697
      %v717 = vadd.f32 %v678, %v697
      %v718 = vadd.f32 %v679, %v697
      %v719 = vadd.f32 %v680, %v697
      %v720 = vadd.f32 %v681, %v697
      %v721 = vadd.f32 %v682, %v697
      %v722 = vadd.f32 %v683, %v697
      %v723 = vadd.f32 %v684, %v697
      %v724 = vadd.f32 %v685, %v697
      %v725 = vadd.f32 %v686, %v697
      %v726 = vadd.f32 %v687, %v697
      %v727 = vadd.f32 %v688, %v697
      %v728 = vadd.f32 %v689, %v697
      %v729 = vadd.f32 %v690, %v697
      %v730 = vadd.f32 %v691, %v697
      %v731 = vpack.c.bf16 %v700, %v699
      %v732 = vpack.c.bf16 %v702, %v701
      %v733 = vpack.c.bf16 %v704, %v703
      %v734 = vpack.c.bf16 %v706, %v705
      %v735 = vpack.c.bf16 %v708, %v707
      %v736 = vpack.c.bf16 %v710, %v709
      %v737 = vpack.c.bf16 %v712, %v711
      %v738 = vpack.c.bf16 %v714, %v713
      %v739 = vpack.c.bf16 %v716, %v715
      %v740 = vpack.c.bf16 %v718, %v717
      %v741 = vpack.c.bf16 %v720, %v719
      %v742 = vpack.c.bf16 %v722, %v721
      %v743 = vpack.c.bf16 %v724, %v723
      %v744 = vpack.c.bf16 %v726, %v725
      %v745 = vpack.c.bf16 %v728, %v727
      %v746 = vpack.c.bf16 %v730, %v729
      %v763 = vunpack.c.l.b16 %v731
      %v764 = vunpack.c.h.b16 %v731
      %v765 = vunpack.c.l.b16 %v732
      %v766 = vunpack.c.h.b16 %v732
      %v767 = vunpack.c.l.b16 %v733
      %v768 = vunpack.c.h.b16 %v733
      %v769 = vunpack.c.l.b16 %v734
      %v770 = vunpack.c.h.b16 %v734
      %v771 = vunpack.c.l.b16 %v735
      %v772 = vunpack.c.h.b16 %v735
      %v773 = vunpack.c.l.b16 %v736
      %v774 = vunpack.c.h.b16 %v736
      %v775 = vunpack.c.l.b16 %v737
      %v776 = vunpack.c.h.b16 %v737
      %v777 = vunpack.c.l.b16 %v738
      %v778 = vunpack.c.h.b16 %v738
      %v779 = vunpack.c.l.b16 %v739
      %v780 = vunpack.c.h.b16 %v739
      %v781 = vunpack.c.l.b16 %v740
      %v782 = vunpack.c.h.b16 %v740
      %v783 = vunpack.c.l.b16 %v741
      %v784 = vunpack.c.h.b16 %v741
      %v785 = vunpack.c.l.b16 %v742
      %v786 = vunpack.c.h.b16 %v742
      %v787 = vunpack.c.l.b16 %v743
      %v788 = vunpack.c.h.b16 %v743
      %v789 = vunpack.c.l.b16 %v744
      %v790 = vunpack.c.h.b16 %v744
      %v791 = vunpack.c.l.b16 %v745
      %v792 = vunpack.c.h.b16 %v745
      %v793 = vunpack.c.l.b16 %v746
      %v794 = vunpack.c.h.b16 %v746
      %v795 = vpack.c.b16 %v763, %v763
      %v796 = vpack.c.b16 %v764, %v764
      %v797 = vpack.c.b16 %v765, %v765
      %v798 = vpack.c.b16 %v766, %v766
      %v799 = vpack.c.b16 %v767, %v767
      %v800 = vpack.c.b16 %v768, %v768
      %v801 = vpack.c.b16 %v769, %v769
      %v802 = vpack.c.b16 %v770, %v770
      %v803 = vpack.c.b16 %v771, %v771
      %v804 = vpack.c.b16 %v772, %v772
      %v805 = vpack.c.b16 %v773, %v773
      %v806 = vpack.c.b16 %v774, %v774
      %v807 = vpack.c.b16 %v775, %v775
      %v808 = vpack.c.b16 %v776, %v776
      %v809 = vpack.c.b16 %v777, %v777
      %v810 = vpack.c.b16 %v778, %v778
      %v811 = vpack.c.b16 %v779, %v779
      %v812 = vpack.c.b16 %v780, %v780
      %v813 = vpack.c.b16 %v781, %v781
      %v814 = vpack.c.b16 %v782, %v782
      %v815 = vpack.c.b16 %v783, %v783
      %v816 = vpack.c.b16 %v784, %v784
      %v817 = vpack.c.b16 %v785, %v785
      %v818 = vpack.c.b16 %v786, %v786
      %v819 = vpack.c.b16 %v787, %v787
      %v820 = vpack.c.b16 %v788, %v788
      %v821 = vpack.c.b16 %v789, %v789
      %v822 = vpack.c.b16 %v790, %v790
      %v823 = vpack.c.b16 %v791, %v791
      %v824 = vpack.c.b16 %v792, %v792
      %v825 = vpack.c.b16 %v793, %v793
      %v826 = vpack.c.b16 %v794, %v794
      %859 = vst [vmem:[#allocation8] sm:$0xf] %v795
      %860 = vst [vmem:[#allocation8 + $0x4] sm:$0xf] %v796
      %861 = vst [vmem:[#allocation8 + $0x8] sm:$0xf] %v797
      %862 = vst [vmem:[#allocation8 + $0xc] sm:$0xf] %v798
      %863 = vst [vmem:[#allocation8 + $0x10] sm:$0xf] %v799
      %864 = vst [vmem:[#allocation8 + $0x14] sm:$0xf] %v800
      %865 = vst [vmem:[#allocation8 + $0x18] sm:$0xf] %v801
      %866 = vst [vmem:[#allocation8 + $0x1c] sm:$0xf] %v802
      %867 = vst [vmem:[#allocation8 + $0x20] sm:$0xf] %v803
      %868 = vst [vmem:[#allocation8 + $0x24] sm:$0xf] %v804
      %869 = vst [vmem:[#allocation8 + $0x28] sm:$0xf] %v805
      %870 = vst [vmem:[#allocation8 + $0x2c] sm:$0xf] %v806
      %871 = vst [vmem:[#allocation8 + $0x30] sm:$0xf] %v807
      %872 = vst [vmem:[#allocation8 + $0x34] sm:$0xf] %v808
      %873 = vst [vmem:[#allocation8 + $0x38] sm:$0xf] %v809
      %874 = vst [vmem:[#allocation8 + $0x3c] sm:$0xf] %v810
      %875 = vst [vmem:[#allocation8 + $0x40] sm:$0xf] %v811
      %876 = vst [vmem:[#allocation8 + $0x44] sm:$0xf] %v812
      %877 = vst [vmem:[#allocation8 + $0x48] sm:$0xf] %v813
      %878 = vst [vmem:[#allocation8 + $0x4c] sm:$0xf] %v814
      %879 = vst [vmem:[#allocation8 + $0x50] sm:$0xf] %v815
      %880 = vst [vmem:[#allocation8 + $0x54] sm:$0xf] %v816
      %881 = vst [vmem:[#allocation8 + $0x58] sm:$0xf] %v817
      %882 = vst [vmem:[#allocation8 + $0x5c] sm:$0xf] %v818
      %883 = vst [vmem:[#allocation8 + $0x60] sm:$0xf] %v819
      %884 = vst [vmem:[#allocation8 + $0x64] sm:$0xf] %v820
      %885 = vst [vmem:[#allocation8 + $0x68] sm:$0xf] %v821
      %886 = vst [vmem:[#allocation8 + $0x6c] sm:$0xf] %v822
      %887 = vst [vmem:[#allocation8 + $0x70] sm:$0xf] %v823
      %888 = vst [vmem:[#allocation8 + $0x74] sm:$0xf] %v824
      %889 = vst [vmem:[#allocation8 + $0x78] sm:$0xf] %v825
      %890 = vst [vmem:[#allocation8 + $0x7c] sm:$0xf] %v826
    $region29: #{tpu_custom_call.1} parent=1 // pred_fallthru
      _
    // Predicated region
    $region30: #{tpu_custom_call.1} parent=1 // pred_check
      _
    $region31: #{tpu_custom_call.1} parent=1 // pred_check_branch
      %892 = sbr.rel (0) target = $region33
    $region32: #{tpu_custom_call.1} parent=1 // pred_region
      %s894 = ssub.s32 2048, 2048
      %895 = vsyncadd [#allocation5], %s894
      %s896 = sshll.u32 [#allocation8], 4
      %s897 = int_to_ptr.vmem [resolvable:$true] %s896
      %902 = dma.vmem_to_hbm [thread:$0]  %s897, 2048, %s3, [#allocation5], 64, 64, 4
    $region33: #{tpu_custom_call.1} parent=1 // pred_fallthru
      _
    // Predicated region
    $region34: #{tpu_custom_call.1} parent=1 // pred_check
      _
    $region35: #{tpu_custom_call.1} parent=1 // pred_check_branch
      %904 = sbr.rel (0) target = $region37
    $region36: #{tpu_custom_call.1} parent=1 // pred_region
      %905 = dma.done [#allocation5], 2048
    $region37: #{tpu_custom_call.1} parent=1 // pred_fallthru
      _
    %906 = vsyncpa [#allocation4], 1
    %907 = vsyncpa [#allocation7], 1
    %908 = vsyncpa [#allocation5], 1

</llo_original>
